<compile_context>
chip_gen: v7x
topology: tpu7x:2x2x1
jax: 0.10.0
libtpu: 0.0.40
codegen_flags: <defaults>
</compile_context>

<pallas_src>
import functools

import jax
import jax.numpy as jnp
from jax.experimental import pallas as pl
from jax.experimental.pallas import tpu as pltpu

# Rows of the packed per-feature parameter arrays (8 sublanes each).
_PRE_ALPHA, _PRE_BETA = 0, 1                 # `pre`  (input-feature vectors)
_BIAS, _POST_ALPHA, _POST_BETA = 0, 1, 2     # `post` (output-feature vectors)


def _round_up(n, m):
    return ((n + m - 1) // m) * m


def _cdiv(a, b):
    return -(-a // b)


def _device_vmem_bytes():
    try:
        cap = getattr(pltpu.get_tpu_info(), "vmem_capacity_bytes", None)
        if cap:
            return int(cap)
    except Exception:
        pass
    return 64 << 20   # conservative default (v7x per-TensorCore)


def _largest_divisor_tile(total, desired, align):
    """Largest multiple of `align` that divides `total` and is <= desired."""
    best, t = align, align
    while t <= total:
        if total % t == 0 and t <= desired:
            best = t
        t += align
    return best


def _block_compute(x, x_res, w, pre_ref, post_ref, *, skip_scale, affine, out_dtype):
    # pre_norm (Affine) or Identity -- f32 on the VPU.
    if affine:
        xn = pre_ref[_PRE_ALPHA:_PRE_ALPHA + 1, :] * x + pre_ref[_PRE_BETA:_PRE_BETA + 1, :]
    else:
        xn = x
    # Linear on the MXU; optional bf16 operands, always f32 accumulation.
    if w.dtype != xn.dtype:
        xn = xn.astype(w.dtype)
    y = jnp.dot(xn, w, preferred_element_type=jnp.float32)
    y = y + post_ref[_BIAS:_BIAS + 1, :]
    # post_norm (Affine) or Identity.
    if affine:
        y = post_ref[_POST_ALPHA:_POST_ALPHA + 1, :] * y + post_ref[_POST_BETA:_POST_BETA + 1, :]
    # residual add + skip scaling.
    return ((y + x_res) * skip_scale).astype(out_dtype)


def _resblock_kernel_resident(x_ref, w_ref, pre_ref, post_ref, o_ref, *,
                              skip_scale, affine):
    x = x_ref[...]
    o_ref[...] = _block_compute(x, x, w_ref[...], pre_ref, post_ref,
                                skip_scale=skip_scale, affine=affine,
                                out_dtype=o_ref.dtype)


def _resblock_kernel_ntiled(x_ref, xres_ref, w_ref, pre_ref, post_ref, o_ref, *,
                            skip_scale, affine):
    o_ref[...] = _block_compute(x_ref[...], xres_ref[...], w_ref[...],
                                pre_ref, post_ref,
                                skip_scale=skip_scale, affine=affine,
                                out_dtype=o_ref.dtype)


def prepare_pure_resnet_block(w, b, pre_alpha=None, pre_beta=None,
                              post_alpha=None, post_beta=None, *,
                              matmul_dtype=None):
    """One-time (ahead-of-time) padding / casting / packing of block params.

    w: [in_dim, out_dim] (transpose of the PyTorch nn.Linear weight).
    Call ONCE; reuse the returned dict for every pure_resnet_block call.
    """
    d_in, d_out = w.shape
    assert d_in == d_out, "residual add requires in_dim == out_dim"
    D = d_in
    if matmul_dtype is None:
        # bf16 MXU operands once the matmul is large enough to be MXU-bound;
        # elementwise / accumulation stay f32 (v5e VPU has no bf16).
        matmul_dtype = jnp.bfloat16 if D >= 512 else jnp.float32
    Dp = _round_up(max(D, 128), 128)

    w_p = jnp.zeros((Dp, Dp), matmul_dtype).at[:D, :D].set(w.astype(matmul_dtype))

    affine = pre_alpha is not None
    pre = jnp.zeros((8, Dp), jnp.float32)
    post = jnp.zeros((8, Dp), jnp.float32)
    post = post.at[_BIAS, :D].set(jnp.reshape(b, (-1,)).astype(jnp.float32))
    if affine:
        pre = pre.at[_PRE_ALPHA, :D].set(jnp.reshape(pre_alpha, (-1,)).astype(jnp.float32))
        pre = pre.at[_PRE_BETA, :D].set(jnp.reshape(pre_beta, (-1,)).astype(jnp.float32))
        post = post.at[_POST_ALPHA, :D].set(jnp.reshape(post_alpha, (-1,)).astype(jnp.float32))
        post = post.at[_POST_BETA, :D].set(jnp.reshape(post_beta, (-1,)).astype(jnp.float32))
    return {"w": w_p, "pre": pre, "post": post, "dim": D, "affine": affine}


def fold_affine_into_linear(w, b, pre_alpha, pre_beta, post_alpha, post_beta):
    """One-time (inference) fold of pre/post Affine into W, b.

    After folding, prepare with no affine params (Identity norms):
    o = (x @ W' + b' + x) * skip_scale.
    """
    pre_alpha = jnp.reshape(pre_alpha, (-1, 1))
    pre_beta = jnp.reshape(pre_beta, (1, -1))
    post_alpha = jnp.reshape(post_alpha, (1, -1))
    post_beta = jnp.reshape(post_beta, (1, -1))
    b = jnp.reshape(b, (1, -1))
    w_f = (pre_alpha * w) * post_alpha
    b_f = (pre_beta @ w + b) * post_alpha + post_beta
    return w_f, jnp.reshape(b_f, (-1,))


def pure_resnet_block(x, params, *, skip_scale=1.0, tm=None, tn=None,
                      out_dtype=jnp.float32):
    """x: [B, D].  params: output of prepare_pure_resnet_block (one-time)."""
    B, D = x.shape
    w_p, pre_p, post_p = params["w"], params["pre"], params["post"]
    affine = params["affine"]
    assert D == params["dim"], "feature dim mismatch with prepared params"
    Dp = w_p.shape[0]

    w_bytes = jnp.dtype(w_p.dtype).itemsize
    out_bytes = jnp.dtype(out_dtype).itemsize

    vmem_cap = _device_vmem_bytes()
    budget = max(vmem_cap - (6 << 20), 8 << 20)

    # Weight residency: keep W fully resident (single-buffered) unless it
    # would eat more than ~1/3 of VMEM; otherwise stream (Dp, tn) column tiles
    # over a second grid axis (K stays whole -> no accumulator needed).
    if tn is None:
        if Dp * Dp * w_bytes <= budget // 3:
            tn = Dp
        else:
            desired = max(128, ((budget // 3) // (2 * Dp * w_bytes)) // 128 * 128)
            tn = _largest_divisor_tile(Dp, desired, 128)
    tn = int(tn)
    assert tn % 128 == 0 and Dp % tn == 0, "tn must be a 128-multiple dividing padded D"
    n_tiled = tn < Dp

    if n_tiled:
        fixed = (8 * Dp * 4                      # pre vectors (Buffered(1))
                 + 2 * Dp * tn * w_bytes         # streamed weight columns
                 + 2 * 8 * tn * 4)               # bias/post vectors
        per_row = 2 * Dp * 4 + 2 * tn * 4 + 2 * tn * out_bytes
    else:
        fixed = Dp * Dp * w_bytes + 2 * (8 * Dp * 4)   # W + pre + post (Buffered(1))
        per_row = 2 * Dp * 4 + 2 * Dp * out_bytes      # x + out, double-buffered

    B8 = _round_up(B, 8)
    if tm is None:
        tm_fit = max(8, ((budget - fixed) // per_row) // 8 * 8)
        tm = min(B8, 1024, tm_fit)
        # Keep >= 2 batch steps when possible so dimension_semantics
        # ("parallel", ...) can shard across v7x's two TensorCores.
        if B8 >= 16:
            tm = min(tm, _round_up(_cdiv(B8, 2), 8))
    tm = max(8, (int(tm) // 8) * 8)
    Bp = _round_up(B, tm)

    vmem_need = fixed + tm * per_row
    vmem_limit = min(max(int(vmem_need * 1.25) + (1 << 20), 16 << 20),
                     vmem_cap - (4 << 20))

    if x.dtype != jnp.float32:
        x = x.astype(jnp.float32)
    needs_pad = (Bp != B) or (Dp != D)
    x_in = x if not needs_pad else jnp.zeros((Bp, Dp), jnp.float32).at[:B, :D].set(x)

    skip = float(skip_scale)
    if n_tiled:
        kernel = functools.partial(_resblock_kernel_ntiled,
                                   skip_scale=skip, affine=affine)
        grid = (Bp // tm, Dp // tn)
        in_specs = [
            pl.BlockSpec((tm, Dp), lambda i, n: (i, 0)),               # x (full columns)
            pl.BlockSpec((tm, tn), lambda i, n: (i, n)),               # residual columns
            pl.BlockSpec((Dp, tn), lambda i, n: (0, n)),               # weight column tile
            pl.BlockSpec((8, Dp), lambda i, n: (0, 0),
                         pipeline_mode=pl.Buffered(1)),                # pre vectors
            pl.BlockSpec((8, tn), lambda i, n: (0, n)),                # bias / post vectors
        ]
        out_specs = pl.BlockSpec((tm, tn), lambda i, n: (i, n))
        operands = (x_in, x_in, w_p, pre_p, post_p)
        semantics = ("parallel", "parallel")
    else:
        kernel = functools.partial(_resblock_kernel_resident,
                                   skip_scale=skip, affine=affine)
        grid = (Bp // tm,)
        in_specs = [
            pl.BlockSpec((tm, Dp), lambda i: (i, 0)),                  # x tile
            pl.BlockSpec((Dp, Dp), lambda i: (0, 0),
                         pipeline_mode=pl.Buffered(1)),                # resident weight
            pl.BlockSpec((8, Dp), lambda i: (0, 0),
                         pipeline_mode=pl.Buffered(1)),                # pre vectors
            pl.BlockSpec((8, Dp), lambda i: (0, 0),
                         pipeline_mode=pl.Buffered(1)),                # bias / post vectors
        ]
        out_specs = pl.BlockSpec((tm, Dp), lambda i: (i, 0))
        operands = (x_in, w_p, pre_p, post_p)
        semantics = ("parallel",)

    out = pl.pallas_call(
        kernel,
        out_shape=jax.ShapeDtypeStruct((Bp, Dp), out_dtype),
        grid_spec=pltpu.PrefetchScalarGridSpec(
            num_scalar_prefetch=0,
            grid=grid,
            in_specs=in_specs,
            out_specs=out_specs,
        ),
        compiler_params=pltpu.CompilerParams(
            dimension_semantics=semantics,
            vmem_limit_bytes=int(vmem_limit)),
    )(*operands)

    return out if not needs_pad else out[:B, :D]


if __name__ == "__main__":
    key = jax.random.PRNGKey(0)

    def make_case(k, B, D):
        kx, kw, kb, kpa, kpb, kqa, kqb = jax.random.split(k, 7)
        x = jax.random.normal(kx, (B, D), dtype=jnp.float32)
        bound = 1.0 / jnp.sqrt(jnp.float32(D))
        w_torch = jax.random.uniform(kw, (D, D), jnp.float32, -bound, bound)  # [out,in]
        w = w_torch.T                                                          # [in,out]
        b = jax.random.uniform(kb, (D,), jnp.float32, -bound, bound)
        pre_alpha = 1.0 + 0.01 * jax.random.normal(kpa, (D,), jnp.float32)
        pre_beta = 0.01 * jax.random.normal(kpb, (D,), jnp.float32)
        post_alpha = 1.0 + 0.01 * jax.random.normal(kqa, (D,), jnp.float32)
        post_beta = 0.01 * jax.random.normal(kqb, (D,), jnp.float32)
        return x, w, b, pre_alpha, pre_beta, post_alpha, post_beta

    def reference(x, w, b, pa, pb, qa, qb, skip_scale):
        return (qa * ((pa * x + pb) @ w + b) + qb + x) * skip_scale

    k1, k2, k3 = jax.random.split(key, 3)

    # Case 1: module-sized shapes (batch=8, in_dim=out_dim=32), affine path,
    # f32 matmul, single grid step, lane-padded D, resident weight.
    B, D = 8, 32
    x, w, b, pa, pb, qa, qb = make_case(k1, B, D)
    params1 = prepare_pure_resnet_block(w, b, pa, pb, qa, qb,
                                        matmul_dtype=jnp.float32)
    out1 = jax.block_until_ready(pure_resnet_block(x, params1, skip_scale=1.0))
    ref1 = reference(x, w, b, pa, pb, qa, qb, 1.0)
    assert out1.shape == (B, D)
    assert jnp.allclose(out1, ref1, atol=1e-5, rtol=1e-5), "f32 path mismatch"

    # Case 2: aligned fast path (no pad/slice), 2 parallel batch tiles,
    # bf16 matmul operands + bf16 output.
    B2, D2 = 256, 128
    x2, w2, b2, pa2, pb2, qa2, qb2 = make_case(k2, B2, D2)
    params2 = prepare_pure_resnet_block(w2, b2, pa2, pb2, qa2, qb2,
                                        matmul_dtype=jnp.bfloat16)
    out2 = jax.block_until_ready(
        pure_resnet_block(x2, params2, skip_scale=0.5, out_dtype=jnp.bfloat16))
    ref2 = reference(x2, w2, b2, pa2, pb2, qa2, qb2, 0.5)
    assert out2.shape == (B2, D2) and out2.dtype == jnp.bfloat16
    assert jnp.allclose(out2.astype(jnp.float32), ref2, atol=5e-2, rtol=5e-2), \
        "bf16 path mismatch"

    # Case 3: output-column weight tiling path (2x2 grid, streamed W columns).
    B3, D3 = 128, 256
    x3, w3, b3, pa3, pb3, qa3, qb3 = make_case(k3, B3, D3)
    params3 = prepare_pure_resnet_block(w3, b3, pa3, pb3, qa3, qb3,
                                        matmul_dtype=jnp.float32)
    out3 = jax.block_until_ready(
        pure_resnet_block(x3, params3, skip_scale=0.5, tn=128))
    ref3 = reference(x3, w3, b3, pa3, pb3, qa3, qb3, 0.5)
    assert out3.shape == (B3, D3)
    assert jnp.allclose(out3, ref3, atol=5e-4, rtol=5e-4), "n-tiled path mismatch"

    # Case 4: one-time folded-affine inference path (Identity norms in-kernel).
    w_f, b_f = fold_affine_into_linear(w3, b3, pa3, pb3, qa3, qb3)
    params4 = prepare_pure_resnet_block(w_f, b_f, matmul_dtype=jnp.float32)
    out4 = jax.block_until_ready(pure_resnet_block(x3, params4, skip_scale=0.5))
    assert jnp.allclose(out4, ref3, atol=5e-4, rtol=5e-4), "folded path mismatch"

    print("KERNEL_OK")
</pallas_src>

<mosaic_0001>
module attributes {stable_mosaic.version = 11 : i64} {
  func.func @_resblock_kernel_resident(%arg0: i32, %arg1: memref<8x128xf32, #tpu.memory_space<vmem>>, %arg2: memref<128x128xf32, #tpu.memory_space<vmem>>, %arg3: memref<8x128xf32, #tpu.memory_space<vmem>>, %arg4: memref<8x128xf32, #tpu.memory_space<vmem>>, %arg5: memref<8x128xf32, #tpu.memory_space<vmem>>) attributes {dimension_semantics = [#tpu.dimension_semantics<parallel>], iteration_bounds = array<i64: 1>, scalar_prefetch = 0 : i64, scratch_operands = 0 : i64, tpu.core_type = #tpu.core_type<tc>, window_params = [{transform_indices = @transform_0, window_bounds = array<i64: 8, 128>}, {pipeline_mode = #tpu.pipeline_mode<synchronous>, transform_indices = @transform_1, window_bounds = array<i64: 128, 128>}, {pipeline_mode = #tpu.pipeline_mode<synchronous>, transform_indices = @transform_2, window_bounds = array<i64: 8, 128>}, {pipeline_mode = #tpu.pipeline_mode<synchronous>, transform_indices = @transform_3, window_bounds = array<i64: 8, 128>}, {transform_indices = @transform_4, window_bounds = array<i64: 8, 128>}]} {
    %c0 = arith.constant 0 : index
    %c0_0 = arith.constant 0 : index
    %0 = vector.load %arg1[%c0, %c0_0] : memref<8x128xf32, #tpu.memory_space<vmem>>, vector<8x128xf32>
    %c0_1 = arith.constant 0 : index
    %c0_2 = arith.constant 0 : index
    %1 = vector.load %arg2[%c0_1, %c0_2] : memref<128x128xf32, #tpu.memory_space<vmem>>, vector<128x128xf32>
    %c0_3 = arith.constant 0 : index
    %c0_4 = arith.constant 0 : index
    %2 = vector.load %arg3[%c0_3, %c0_4] : memref<8x128xf32, #tpu.memory_space<vmem>>, vector<1x128xf32>
    %3 = vector.broadcast %2 : vector<1x128xf32> to vector<8x128xf32>
    %4 = arith.mulf %3, %0 : vector<8x128xf32>
    %c1 = arith.constant 1 : index
    %c0_5 = arith.constant 0 : index
    %5 = vector.load %arg3[%c1, %c0_5] : memref<8x128xf32, #tpu.memory_space<vmem>>, vector<1x128xf32>
    %6 = vector.broadcast %5 : vector<1x128xf32> to vector<8x128xf32>
    %7 = arith.addf %4, %6 : vector<8x128xf32>
    %cst = arith.constant dense<0.000000e+00> : vector<8x128xf32>
    %8 = tpu.matmul %7, %1, %cst {dimension_numbers = #tpu.dot_dimension_numbers<[1], [0], [0], [1], [0, 0, 1, 1], [], []>} : vector<8x128xf32>, vector<128x128xf32>, vector<8x128xf32> -> vector<8x128xf32>
    %c0_6 = arith.constant 0 : index
    %c0_7 = arith.constant 0 : index
    %9 = vector.load %arg4[%c0_6, %c0_7] : memref<8x128xf32, #tpu.memory_space<vmem>>, vector<1x128xf32>
    %10 = vector.broadcast %9 : vector<1x128xf32> to vector<8x128xf32>
    %11 = arith.addf %8, %10 : vector<8x128xf32>
    %c1_8 = arith.constant 1 : index
    %c0_9 = arith.constant 0 : index
    %12 = vector.load %arg4[%c1_8, %c0_9] : memref<8x128xf32, #tpu.memory_space<vmem>>, vector<1x128xf32>
    %13 = vector.broadcast %12 : vector<1x128xf32> to vector<8x128xf32>
    %14 = arith.mulf %13, %11 : vector<8x128xf32>
    %c2 = arith.constant 2 : index
    %c0_10 = arith.constant 0 : index
    %15 = vector.load %arg4[%c2, %c0_10] : memref<8x128xf32, #tpu.memory_space<vmem>>, vector<1x128xf32>
    %16 = vector.broadcast %15 : vector<1x128xf32> to vector<8x128xf32>
    %17 = arith.addf %14, %16 : vector<8x128xf32>
    %18 = arith.addf %17, %0 : vector<8x128xf32>
    %cst_11 = arith.constant 1.000000e+00 : f32
    %19 = vector.broadcast %cst_11 : f32 to vector<8x128xf32>
    %20 = arith.mulf %18, %19 : vector<8x128xf32>
    %c0_12 = arith.constant 0 : index
    %c0_13 = arith.constant 0 : index
    %21 = vector.load %arg5[%c0_12, %c0_13] : memref<8x128xf32, #tpu.memory_space<vmem>>, vector<8x128xf32>
    tpu.vector_store %arg5[%c0_12, %c0_13], %20 {strides = array<i32>} : memref<8x128xf32, #tpu.memory_space<vmem>>, vector<8x128xf32>,
    return
  }
  func.func @transform_0(%arg0: i32) -> (i32, i32) {
    %c0_i32 = arith.constant 0 : i32
    %c0_i32_0 = arith.constant 0 : i32
    return %arg0, %c0_i32 : i32, i32
  }
  func.func @transform_1(%arg0: i32) -> (i32, i32) {
    %c0_i32 = arith.constant 0 : i32
    %c0_i32_0 = arith.constant 0 : i32
    %c0_i32_1 = arith.constant 0 : i32
    return %c0_i32, %c0_i32_0 : i32, i32
  }
  func.func @transform_2(%arg0: i32) -> (i32, i32) {
    %c0_i32 = arith.constant 0 : i32
    %c0_i32_0 = arith.constant 0 : i32
    %c0_i32_1 = arith.constant 0 : i32
    return %c0_i32, %c0_i32_0 : i32, i32
  }
  func.func @transform_3(%arg0: i32) -> (i32, i32) {
    %c0_i32 = arith.constant 0 : i32
    %c0_i32_0 = arith.constant 0 : i32
    %c0_i32_1 = arith.constant 0 : i32
    return %c0_i32, %c0_i32_0 : i32, i32
  }
  func.func @transform_4(%arg0: i32) -> (i32, i32) {
    %c0_i32 = arith.constant 0 : i32
    %c0_i32_0 = arith.constant 0 : i32
    return %arg0, %c0_i32 : i32, i32
  }
}

</mosaic_0001>

<llo_original>
// kernel: tpu_custom_call.1
$region0: #{tpu_custom_call.1}
  #allocation0 [shape = 'u32[]', space=smem, size = 0x4, offset = 0x4, fixed_abs, tag = 'smem constant byte address 0x4 - core index']
  #allocation1 [shape = 'u32[144,128]{1,0:T(1,128)}', space=vmem, size = 0x12000, scoped, tag = 'internal scratch']
  %s0 = inlined_call_operand.hbm [shape: f32[8,128], index: 0, kind: input, shape index: {}]
  %s1 = inlined_call_operand.hbm [shape: f32[128,128], index: 1, kind: input, shape index: {}]
  %s2 = inlined_call_operand.hbm [shape: f32[8,128], index: 2, kind: input, shape index: {}]
  %s3 = inlined_call_operand.vmem [shape: f32[8,128], index: 3, kind: input, shape index: {}]
  %s4 = inlined_call_operand.hbm [shape: f32[8,128], index: 4, kind: output, shape index: {}]
  %s5 = sld [smem:[#allocation0]]
  $region38: #{tpu_custom_call.1} parent=0
    _
  %s7 = ssub.s32 1, %s5
  %s8 = scalar_select 0, %s7, %s5
  $region1: #{tpu_custom_call.1} parent=0
    #allocation2 [shape = 'u8[4096]{0}', space=vmem, size = 0x1000, scoped, tag = 'input window, operand 0, single buffered']
    #allocation3 [shape = 's32[1]{0}', space=sflag, size = 0x4, scoped, tag = 'scoped memory for tpu_custom_call.1']
    #allocation4 [shape = 's32[1]{0}', space=sflag, size = 0x4, scoped, tag = 'scoped memory for tpu_custom_call.1']
    #allocation5 [shape = 'u8[65536]{0}', space=vmem, size = 0x10000, scoped, tag = 'input window, operand 1, single buffered']
    #allocation6 [shape = 's32[1]{0}', space=sflag, size = 0x4, scoped, tag = 'scoped memory for tpu_custom_call.1']
    #allocation7 [shape = 'u8[4096]{0}', space=vmem, size = 0x1000, scoped, tag = 'input window, operand 2, single buffered']
    #allocation8 [shape = 'u8[4096]{0}', space=vmem, size = 0x1000, scoped, tag = 'output window, operand 0, single buffered']
    %9 = vsyncpa [#allocation3], 0
    %10 = vsyncpa [#allocation6], 0
    %11 = vsyncpa [#allocation4], 0
    // Predicated region
    $region2: #{tpu_custom_call.1} parent=1 // pred_check
      _
    $region3: #{tpu_custom_call.1} parent=1 // pred_check_branch
      %13 = sbr.rel (0) target = $region5
    $region4: #{tpu_custom_call.1} parent=1 // pred_region
      %s15 = ssub.s32 128, 128
      %16 = vsyncadd [#allocation3], %s15
      %s18 = sshll.u32 [#allocation2], 4
      %s19 = int_to_ptr.vmem [resolvable:$true] %s18
      %21 = dma.hbm_to_vmem [thread:$0]  %s0, 128, %s19, [#allocation3]
    $region5: #{tpu_custom_call.1} parent=1 // pred_fallthru
      _
    // Predicated region
    $region6: #{tpu_custom_call.1} parent=1 // pred_check
      _
    $region7: #{tpu_custom_call.1} parent=1 // pred_check_branch
      %23 = sbr.rel (0) target = $region9
    $region8: #{tpu_custom_call.1} parent=1 // pred_region
      %s25 = ssub.s32 2048, 2048
      %26 = vsyncadd [#allocation6], %s25
      %s27 = sshll.u32 [#allocation5], 4
      %s28 = int_to_ptr.vmem [resolvable:$true] %s27
      %33 = dma.hbm_to_vmem [thread:$0]  %s1, 2048, %s28, [#allocation6], 128, 128, 8
    $region9: #{tpu_custom_call.1} parent=1 // pred_fallthru
      _
    // Predicated region
    $region10: #{tpu_custom_call.1} parent=1 // pred_check
      _
    $region11: #{tpu_custom_call.1} parent=1 // pred_check_branch
      %35 = sbr.rel (0) target = $region13
    $region12: #{tpu_custom_call.1} parent=1 // pred_region
      %s37 = ssub.s32 128, 128
      %38 = vsyncadd [#allocation6], %s37
      %s40 = sshll.u32 [#allocation7], 4
      %s41 = int_to_ptr.vmem [resolvable:$true] %s40
      %43 = dma.hbm_to_vmem [thread:$0]  %s2, 128, %s41, [#allocation6]
    $region13: #{tpu_custom_call.1} parent=1 // pred_fallthru
      _
    // Predicated region
    $region14: #{tpu_custom_call.1} parent=1 // pred_check
      _
    $region15: #{tpu_custom_call.1} parent=1 // pred_check_branch
      %45 = sbr.rel (0) target = $region17
    $region16: #{tpu_custom_call.1} parent=1 // pred_region
      _
    $region17: #{tpu_custom_call.1} parent=1 // pred_fallthru
      _
    // Predicated region
    $region18: #{tpu_custom_call.1} parent=1 // pred_check
      _
    $region19: #{tpu_custom_call.1} parent=1 // pred_check_branch
      %47 = sbr.rel (0) target = $region21
    $region20: #{tpu_custom_call.1} parent=1 // pred_region
      %48 = dma.done [#allocation3], 128
    $region21: #{tpu_custom_call.1} parent=1 // pred_fallthru
      _
    // Predicated region
    $region22: #{tpu_custom_call.1} parent=1 // pred_check
      _
    $region23: #{tpu_custom_call.1} parent=1 // pred_check_branch
      %50 = sbr.rel (0) target = $region25
    $region24: #{tpu_custom_call.1} parent=1 // pred_region
      %51 = dma.done [#allocation6], 2048
    $region25: #{tpu_custom_call.1} parent=1 // pred_fallthru
      _
    // Predicated region
    $region26: #{tpu_custom_call.1} parent=1 // pred_check
      _
    $region27: #{tpu_custom_call.1} parent=1 // pred_check_branch
      %53 = sbr.rel (0) target = $region29
    $region28: #{tpu_custom_call.1} parent=1 // pred_region
      %54 = dma.done [#allocation6], 128
    $region29: #{tpu_custom_call.1} parent=1 // pred_fallthru
      _
    %v55 = vld [vmem:[#allocation2] sm:$0xff]
    %v56 = vld [vmem:[#allocation5] sm:$0xff]
    %v57 = vld [vmem:[#allocation5 + $0x8] sm:$0xff]
    %v58 = vld [vmem:[#allocation5 + $0x10] sm:$0xff]
    %v59 = vld [vmem:[#allocation5 + $0x18] sm:$0xff]
    %v60 = vld [vmem:[#allocation5 + $0x20] sm:$0xff]
    %v61 = vld [vmem:[#allocation5 + $0x28] sm:$0xff]
    %v62 = vld [vmem:[#allocation5 + $0x30] sm:$0xff]
    %v63 = vld [vmem:[#allocation5 + $0x38] sm:$0xff]
    %v64 = vld [vmem:[#allocation5 + $0x40] sm:$0xff]
    %v65 = vld [vmem:[#allocation5 + $0x48] sm:$0xff]
    %v66 = vld [vmem:[#allocation5 + $0x50] sm:$0xff]
    %v67 = vld [vmem:[#allocation5 + $0x58] sm:$0xff]
    %v68 = vld [vmem:[#allocation5 + $0x60] sm:$0xff]
    %v69 = vld [vmem:[#allocation5 + $0x68] sm:$0xff]
    %v70 = vld [vmem:[#allocation5 + $0x70] sm:$0xff]
    %v71 = vld [vmem:[#allocation5 + $0x78] sm:$0xff]
    %v72 = vld [vmem:[#allocation7] sm:$0x1]
    %v73 = vlaneseq
    %v74 = vshrl.u32 %v73, 7
    %v75 = vsub.s32 0, %v74
    %v76 = vrot.slane %v72, %v75
    %v77 = vmul.f32 %v76, %v55
    %v78 = vld [vmem:[#allocation7 + $0x1] sm:$0x1]
    %v79 = vlaneseq
    %v80 = vshrl.u32 %v79, 7
    %v81 = vsub.s32 0, %v80
    %v82 = vrot.slane %v78, %v81
    %v83 = vadd.f32 %v77, %v82
    %v84 = vld [vmem:[%s3] sm:$0x1]
    %v85 = vlaneseq
    %v86 = vshrl.u32 %v85, 7
    %v87 = vsub.s32 0, %v86
    %v88 = vrot.slane %v84, %v87
    %89 = vmatprep.subr.mxu0 0.0
    %90 = vmatpush1.msra.mxu0 %v56
    %91 = vmatprep.subr.mxu0 0.0
    %92 = vmatpush1.msra.mxu0 %v57
    %93 = vmatprep.subr.mxu0 0.0
    %94 = vmatpush1.msra.mxu0 %v58
    %95 = vmatprep.subr.mxu0 0.0
    %96 = vmatpush1.msra.mxu0 %v59
    %97 = vmatprep.subr.mxu0 0.0
    %98 = vmatpush1.msra.mxu0 %v60
    %99 = vmatprep.subr.mxu0 0.0
    %100 = vmatpush1.msra.mxu0 %v61
    %101 = vmatprep.subr.mxu0 0.0
    %102 = vmatpush1.msra.mxu0 %v62
    %103 = vmatprep.subr.mxu0 0.0
    %104 = vmatpush1.msra.mxu0 %v63
    %105 = vmatprep.subr.mxu0 0.0
    %106 = vmatpush1.msra.mxu0 %v64
    %107 = vmatprep.subr.mxu0 0.0
    %108 = vmatpush1.msra.mxu0 %v65
    %109 = vmatprep.subr.mxu0 0.0
    %110 = vmatpush1.msra.mxu0 %v66
    %111 = vmatprep.subr.mxu0 0.0
    %112 = vmatpush1.msra.mxu0 %v67
    %113 = vmatprep.subr.mxu0 0.0
    %114 = vmatpush1.msra.mxu0 %v68
    %115 = vmatprep.subr.mxu0 0.0
    %116 = vmatpush1.msra.mxu0 %v69
    %117 = vmatprep.subr.mxu0 0.0
    %118 = vmatpush1.msra.mxu0 %v70
    %119 = vmatprep.subr.mxu0 0.0
    %120 = vmatpush1.msra.mxu0 %v71
    %121 = vmatprep.subr.mxu0 0.0
    %122 = vmatpush1.msra.mxu0 0.0
    %123 = vmatprep.subr.mxu0 0.0
    %124 = vmatpush1.msra.mxu0 0.0
    %125 = vmatprep.subr.mxu0 0.0
    %126 = vmatpush1.msra.mxu0 0.0
    %127 = vmatprep.subr.mxu0 0.0
    %128 = vmatpush1.msra.mxu0 0.0
    %129 = vmatprep.subr.mxu0 0.0
    %130 = vmatpush1.msra.mxu0 0.0
    %131 = vmatprep.subr.mxu0 0.0
    %132 = vmatpush1.msra.mxu0 0.0
    %133 = vmatprep.subr.mxu0 0.0
    %134 = vmatpush1.msra.mxu0 0.0
    %135 = vmatprep.subr.mxu0 0.0
    %136 = vmatpush1.msra.mxu0 0.0
    %137 = vmatprep.subr.mxu0 0.0
    %138 = vmatpush1.msra.mxu0 0.0
    %139 = vmatprep.subr.mxu0 0.0
    %140 = vmatpush1.msra.mxu0 0.0
    %141 = vmatprep.subr.mxu0 0.0
    %142 = vmatpush1.msra.mxu0 0.0
    %143 = vmatprep.subr.mxu0 0.0
    %144 = vmatpush1.msra.mxu0 0.0
    %145 = vmatprep.subr.mxu0 0.0
    %146 = vmatpush1.msra.mxu0 0.0
    %147 = vmatprep.subr.mxu0 0.0
    %148 = vmatpush1.msra.mxu0 0.0
    %149 = vmatprep.subr.mxu0 0.0
    %150 = vmatpush1.msra.mxu0 0.0
    %151 = vmatprep.subr.mxu0 0.0
    %152 = vmatpush1.msra.mxu0 0.0
    %153 = vmatprep.mubr.f32.mxu0 0.0
    %154 = vmatmul.mubr.f32.gmra.mrb[0].mxu0 %v83
    %v155 = vpop.f32.mrb[0].mxu0
    %v156 = vadd.f32 %v88, %v155
    %v157 = vpop.f32.mrb[0].mxu0
    %158 = vdwg.mxu0
    %v159 = vld [vmem:[%s3 + $0x1] sm:$0x1]
    %v160 = vlaneseq
    %v161 = vshrl.u32 %v160, 7
    %v162 = vsub.s32 0, %v161
    %v163 = vrot.slane %v159, %v162
    %v164 = vmul.f32 %v163, %v156
    %v165 = vld [vmem:[%s3 + $0x2] sm:$0x1]
    %v166 = vlaneseq
    %v167 = vshrl.u32 %v166, 7
    %v168 = vsub.s32 0, %v167
    %v169 = vrot.slane %v165, %v168
    %v170 = vadd.f32 %v164, %v169
    %v171 = vadd.f32 %v170, %v55
    %172 = vst [vmem:[#allocation8] sm:$0xff] %v171
    // Predicated region
    $region30: #{tpu_custom_call.1} parent=1 // pred_check
      _
    $region31: #{tpu_custom_call.1} parent=1 // pred_check_branch
      %174 = sbr.rel (0) target = $region33
    $region32: #{tpu_custom_call.1} parent=1 // pred_region
      %s176 = ssub.s32 128, 128
      %177 = vsyncadd [#allocation4], %s176
      %s179 = sshll.u32 [#allocation8], 4
      %s180 = int_to_ptr.vmem [resolvable:$true] %s179
      %182 = dma.vmem_to_hbm [thread:$0]  %s180, 128, %s4, [#allocation4]
    $region33: #{tpu_custom_call.1} parent=1 // pred_fallthru
      _
    // Predicated region
    $region34: #{tpu_custom_call.1} parent=1 // pred_check
      _
    $region35: #{tpu_custom_call.1} parent=1 // pred_check_branch
      %184 = sbr.rel (0) target = $region37
    $region36: #{tpu_custom_call.1} parent=1 // pred_region
      %185 = dma.done [#allocation4], 128
    $region37: #{tpu_custom_call.1} parent=1 // pred_fallthru
      _
    %186 = vsyncpa [#allocation3], 1
    %187 = vsyncpa [#allocation6], 1
    %188 = vsyncpa [#allocation4], 1

</llo_original>
